<compile_context>
chip_gen: v7x
topology: tpu7x:2x2x1
jax: 0.10.0
libtpu: 0.0.40
codegen_flags: <defaults>
</compile_context>

<pallas_src>
import functools

import jax
import jax.numpy as jnp
import numpy as np
from jax.experimental import pallas as pl
from jax.experimental.pallas import tpu as pltpu

EPS = 1e-5


def _down_fused_kernel(x_ref, w1_ref, s1_ref, t1_ref, w2_ref, s2_ref, t2_ref,
                       mask_ref, o_ref, buf1, buf2, *, Ho, Wo):
    """Fused MaxPool2d(2) + (Conv3x3 + BN + ReLU) x 2 for one batch element.

    x_ref : (1, 2, 2, Cin, Ho*Wo)   the four 2x2-pool phases, spatial flattened
    w*_ref: (Cout_i, 9*Cin_i)       conv weights as im2col matrices
    s*/t* : (Cout_i, 1)             folded BN scale / shift (conv bias included)
    mask  : (1, Ho*Wp)              1.0 on valid (non wrap-around) columns
    o_ref : (1, Cout, Ho*Wo)        NCHW output, spatial flattened on lanes
    buf1  : (Cin,  (Ho+2)*(Wo+2)+2) VMEM scratch: zero-padded pooled image
    buf2  : (Cmid, (Ho+2)*(Wo+2)+2) VMEM scratch: zero-padded conv1 output
    """
    Wp = Wo + 2          # padded row width
    M = Ho * Wp          # flat output length (includes 2 wrap columns / row)

    # ---- 2x2 max pool: pure elementwise max of the 4 phases ----------------
    pooled = jnp.maximum(jnp.maximum(x_ref[0, 0, 0], x_ref[0, 0, 1]),
                         jnp.maximum(x_ref[0, 1, 0], x_ref[0, 1, 1]))  # (Cin, Ho*Wo)

    # ---- zero-pad + row-major flatten the pooled image into VMEM -----------
    buf1[...] = jnp.zeros(buf1.shape, buf1.dtype)
    for r in range(Ho):                       # static, unrolled; in-kernel "pad"
        dst = (r + 1) * Wp + 1
        buf1[:, dst:dst + Wo] = pooled[:, r * Wo:r * Wo + Wo]

    mask = mask_ref[...]                      # (1, M)

    def conv_bn_relu(buf, w_ref, s_ref, t_ref):
        # im2col: stack the 9 shifted flat views on sublanes -> ONE MXU dot.
        taps = []
        for dy in range(3):
            for dx in range(3):
                off = dy * Wp + dx
                taps.append(buf[:, off:off + M])          # (Cin_i, M)
        patches = jnp.concatenate(taps, axis=0)           # (9*Cin_i, M)
        y = jnp.dot(w_ref[...], patches,
                    preferred_element_type=jnp.float32)   # (Cout_i, M)
        y = y * s_ref[...] + t_ref[...]                    # conv bias + BN (folded)
        return jnp.maximum(y, 0.0)                         # ReLU

    y1 = conv_bn_relu(buf1, w1_ref, s1_ref, t1_ref)        # (Cmid, M)

    # ---- zero-pad conv1 output for conv2 (mask kills wrap-around columns) ---
    buf2[...] = jnp.zeros(buf2.shape, buf2.dtype)
    buf2[:, Wp + 1:Wp + 1 + M] = y1 * mask

    y2 = conv_bn_relu(buf2, w2_ref, s2_ref, t2_ref)        # (Cout, M)

    # ---- store only the valid columns, NCHW, spatial lane-dense -------------
    for r in range(Ho):
        o_ref[0, :, r * Wo:(r + 1) * Wo] = y2[:, r * Wp:r * Wp + Wo]


def down_forward(x_nchw, p):
    """Forward pass of `Down` (NCHW in, NCHW out) as a single fused pallas_call."""
    N, Cin, H, W = x_nchw.shape
    assert H % 2 == 0 and W % 2 == 0, "MaxPool2d(2) path assumes even H, W"
    Ho, Wo = H // 2, W // 2
    Hp, Wp = Ho + 2, Wo + 2
    M = Ho * Wp
    PAD = Hp * Wp + 2                          # +2 slack for the last 3x3 tap
    Cmid = p['w1'].shape[0]
    Cout = p['w2'].shape[0]

    x = x_nchw.astype(jnp.float32)
    # Expose the four 2x2-pooling phases as leading dims, flatten spatial.
    # (One cheap XLA transpose; replaces the old standalone maxpool kernel and
    #  the NCHW<->NHWC activation round trips.)
    xph = x.reshape(N, Cin, Ho, 2, Wo, 2).transpose(0, 3, 5, 1, 2, 4)
    xph = xph.reshape(N, 2, 2, Cin, Ho * Wo)

    # Fold conv bias + inference-mode BatchNorm into per-channel scale/shift.
    s1 = p['g1'] * jax.lax.rsqrt(p['v1'] + EPS)
    t1 = p['be1'] + (p['b1'] - p['m1']) * s1
    s2 = p['g2'] * jax.lax.rsqrt(p['v2'] + EPS)
    t2 = p['be2'] + (p['b2'] - p['m2']) * s2

    # (Cout, Cin, 3, 3) -> (Cout, 9*Cin), tap-major / cin-minor (im2col order).
    w1m = jnp.transpose(p['w1'], (0, 2, 3, 1)).reshape(Cmid, 9 * Cin)
    w2m = jnp.transpose(p['w2'], (0, 2, 3, 1)).reshape(Cout, 9 * Cmid)

    # 1.0 on columns that are real pixels, 0.0 on the 2 wrap-around columns.
    mask = jnp.asarray(((np.arange(M) % Wp) < Wo).astype(np.float32).reshape(1, M))

    kernel = functools.partial(_down_fused_kernel, Ho=Ho, Wo=Wo)
    out_flat = pl.pallas_call(
        kernel,
        out_shape=jax.ShapeDtypeStruct((N, Cout, Ho * Wo), jnp.float32),
        grid=(N,),
        in_specs=[
            pl.BlockSpec((1, 2, 2, Cin, Ho * Wo), lambda n: (n, 0, 0, 0, 0)),
            pl.BlockSpec((Cmid, 9 * Cin), lambda n: (0, 0)),
            pl.BlockSpec((Cmid, 1), lambda n: (0, 0)),
            pl.BlockSpec((Cmid, 1), lambda n: (0, 0)),
            pl.BlockSpec((Cout, 9 * Cmid), lambda n: (0, 0)),
            pl.BlockSpec((Cout, 1), lambda n: (0, 0)),
            pl.BlockSpec((Cout, 1), lambda n: (0, 0)),
            pl.BlockSpec((1, M), lambda n: (0, 0)),
        ],
        out_specs=pl.BlockSpec((1, Cout, Ho * Wo), lambda n: (n, 0, 0)),
        scratch_shapes=[pltpu.VMEM((Cin, PAD), jnp.float32),
                        pltpu.VMEM((Cmid, PAD), jnp.float32)],
        compiler_params=pltpu.CompilerParams(
            dimension_semantics=("parallel",)),   # batch axis -> 2 TCs on v7x
    )(xph, w1m, s1.reshape(Cmid, 1), t1.reshape(Cmid, 1),
      w2m, s2.reshape(Cout, 1), t2.reshape(Cout, 1), mask)

    # Contiguous (free) reshape back to NCHW.
    return out_flat.reshape(N, Cout, Ho, Wo)


# ------------------------------ parameters ----------------------------------
def init_down_params(key, in_channels, out_channels):
    mid = out_channels
    k = jax.random.split(key, 12)

    def conv_params(kw, kb, ci, co):
        fan_in = ci * 9
        w = jax.random.normal(kw, (co, ci, 3, 3), jnp.float32) / np.sqrt(fan_in)
        b = 0.1 * jax.random.normal(kb, (co,), jnp.float32)
        return w, b

    def bn_params(kg, kb, km, kv, c):
        gamma = 1.0 + 0.1 * jax.random.normal(kg, (c,), jnp.float32)
        beta = 0.1 * jax.random.normal(kb, (c,), jnp.float32)
        mean = 0.1 * jax.random.normal(km, (c,), jnp.float32)
        var = 0.9 + 0.2 * jax.random.uniform(kv, (c,), jnp.float32)
        return gamma, beta, mean, var

    w1, b1 = conv_params(k[0], k[1], in_channels, mid)
    w2, b2 = conv_params(k[2], k[3], mid, out_channels)
    g1, be1, m1, v1 = bn_params(k[4], k[5], k[6], k[7], mid)
    g2, be2, m2, v2 = bn_params(k[8], k[9], k[10], k[11], out_channels)
    return dict(w1=w1, b1=b1, g1=g1, be1=be1, m1=m1, v1=v1,
                w2=w2, b2=b2, g2=g2, be2=be2, m2=m2, v2=v2)


# ------------------------------ reference ------------------------------------
def down_forward_ref(x_nchw, p):
    x = x_nchw.astype(jnp.float32)
    N, C, H, W = x.shape
    x = x.reshape(N, C, H // 2, 2, W // 2, 2).max(axis=(3, 5))

    def block(x, w, b, g, be, m, v):
        y = jax.lax.conv_general_dilated(
            x, w, (1, 1), 'SAME',
            dimension_numbers=('NCHW', 'OIHW', 'NCHW'),
            precision=jax.lax.Precision.HIGHEST)
        y = y + b[None, :, None, None]
        s = g * jax.lax.rsqrt(v + EPS)
        y = (y - m[None, :, None, None]) * s[None, :, None, None] \
            + be[None, :, None, None]
        return jnp.maximum(y, 0.0)

    x = block(x, p['w1'], p['b1'], p['g1'], p['be1'], p['m1'], p['v1'])
    x = block(x, p['w2'], p['b2'], p['g2'], p['be2'], p['m2'], p['v2'])
    return x


if __name__ == "__main__":
    key = jax.random.PRNGKey(0)
    kx, kp = jax.random.split(key)
    in_channels, out_channels = 4, 8
    x = jax.random.normal(kx, (2, in_channels, 16, 16), jnp.float32)
    params = init_down_params(kp, in_channels, out_channels)

    out = jax.block_until_ready(down_forward(x, params))
    ref = jax.block_until_ready(down_forward_ref(x, params))

    assert out.shape == (2, out_channels, 8, 8), out.shape
    np.testing.assert_allclose(np.asarray(out), np.asarray(ref),
                               rtol=5e-3, atol=5e-3)
    print("KERNEL_OK")
</pallas_src>

<mosaic_0001>
module attributes {stable_mosaic.version = 11 : i64} {
  func.func @_down_fused_kernel(%arg0: i32, %arg1: memref<1x2x2x4x64xf32, #tpu.memory_space<vmem>>, %arg2: memref<8x36xf32, #tpu.memory_space<vmem>>, %arg3: memref<8x1xf32, #tpu.memory_space<vmem>>, %arg4: memref<8x1xf32, #tpu.memory_space<vmem>>, %arg5: memref<8x72xf32, #tpu.memory_space<vmem>>, %arg6: memref<8x1xf32, #tpu.memory_space<vmem>>, %arg7: memref<8x1xf32, #tpu.memory_space<vmem>>, %arg8: memref<1x80xf32, #tpu.memory_space<vmem>>, %arg9: memref<1x8x64xf32, #tpu.memory_space<vmem>>, %arg10: memref<4x102xf32, #tpu.memory_space<vmem>>, %arg11: memref<8x102xf32, #tpu.memory_space<vmem>>) attributes {dimension_semantics = [#tpu.dimension_semantics<parallel>], iteration_bounds = array<i64: 2>, scalar_prefetch = 0 : i64, scratch_operands = 2 : i64, tpu.core_type = #tpu.core_type<tc>, window_params = [{transform_indices = @transform_0, window_bounds = array<i64: 1, 2, 2, 4, 64>}, {pipeline_mode = #tpu.pipeline_mode<synchronous>, transform_indices = @transform_1, window_bounds = array<i64: 8, 36>}, {pipeline_mode = #tpu.pipeline_mode<synchronous>, transform_indices = @transform_2, window_bounds = array<i64: 8, 1>}, {pipeline_mode = #tpu.pipeline_mode<synchronous>, transform_indices = @transform_3, window_bounds = array<i64: 8, 1>}, {pipeline_mode = #tpu.pipeline_mode<synchronous>, transform_indices = @transform_4, window_bounds = array<i64: 8, 72>}, {pipeline_mode = #tpu.pipeline_mode<synchronous>, transform_indices = @transform_5, window_bounds = array<i64: 8, 1>}, {pipeline_mode = #tpu.pipeline_mode<synchronous>, transform_indices = @transform_6, window_bounds = array<i64: 8, 1>}, {pipeline_mode = #tpu.pipeline_mode<synchronous>, transform_indices = @transform_7, window_bounds = array<i64: 1, 80>}, {transform_indices = @transform_8, window_bounds = array<i64: 1, 8, 64>}]} {
    %c0 = arith.constant 0 : index
    %c0_0 = arith.constant 0 : index
    %c0_1 = arith.constant 0 : index
    %c0_2 = arith.constant 0 : index
    %c0_3 = arith.constant 0 : index
    %0 = vector.load %arg1[%c0, %c0_0, %c0_1, %c0_2, %c0_3] : memref<1x2x2x4x64xf32, #tpu.memory_space<vmem>>, vector<1x1x1x4x64xf32>
    %1 = vector.shape_cast %0 : vector<1x1x1x4x64xf32> to vector<4x64xf32>
    %c0_4 = arith.constant 0 : index
    %c0_5 = arith.constant 0 : index
    %c1 = arith.constant 1 : index
    %c0_6 = arith.constant 0 : index
    %c0_7 = arith.constant 0 : index
    %2 = vector.load %arg1[%c0_4, %c0_5, %c1, %c0_6, %c0_7] : memref<1x2x2x4x64xf32, #tpu.memory_space<vmem>>, vector<1x1x1x4x64xf32>
    %3 = vector.shape_cast %2 : vector<1x1x1x4x64xf32> to vector<4x64xf32>
    %4 = arith.maximumf %1, %3 : vector<4x64xf32>
    %c0_8 = arith.constant 0 : index
    %c1_9 = arith.constant 1 : index
    %c0_10 = arith.constant 0 : index
    %c0_11 = arith.constant 0 : index
    %c0_12 = arith.constant 0 : index
    %5 = vector.load %arg1[%c0_8, %c1_9, %c0_10, %c0_11, %c0_12] : memref<1x2x2x4x64xf32, #tpu.memory_space<vmem>>, vector<1x1x1x4x64xf32>
    %6 = vector.shape_cast %5 : vector<1x1x1x4x64xf32> to vector<4x64xf32>
    %c0_13 = arith.constant 0 : index
    %c1_14 = arith.constant 1 : index
    %c1_15 = arith.constant 1 : index
    %c0_16 = arith.constant 0 : index
    %c0_17 = arith.constant 0 : index
    %7 = vector.load %arg1[%c0_13, %c1_14, %c1_15, %c0_16, %c0_17] : memref<1x2x2x4x64xf32, #tpu.memory_space<vmem>>, vector<1x1x1x4x64xf32>
    %8 = vector.shape_cast %7 : vector<1x1x1x4x64xf32> to vector<4x64xf32>
    %9 = arith.maximumf %6, %8 : vector<4x64xf32>
    %10 = arith.maximumf %4, %9 : vector<4x64xf32>
    %cst = arith.constant 0.000000e+00 : f32
    %11 = vector.broadcast %cst : f32 to vector<4x102xf32>
    %c0_18 = arith.constant 0 : index
    %c0_19 = arith.constant 0 : index
    %12 = vector.load %arg10[%c0_18, %c0_19] : memref<4x102xf32, #tpu.memory_space<vmem>>, vector<4x102xf32>
    tpu.vector_store %arg10[%c0_18, %c0_19], %11 {strides = array<i32>} : memref<4x102xf32, #tpu.memory_space<vmem>>, vector<4x102xf32>,
    %13 = vector.extract_strided_slice %10 {offsets = [0, 0], sizes = [4, 8], strides = [1, 1]} : vector<4x64xf32> to vector<4x8xf32>
    %c0_20 = arith.constant 0 : index
    %c11 = arith.constant 11 : index
    %14 = vector.load %arg10[%c0_20, %c11] : memref<4x102xf32, #tpu.memory_space<vmem>>, vector<4x8xf32>
    tpu.vector_store %arg10[%c0_20, %c11], %13 {strides = array<i32>} : memref<4x102xf32, #tpu.memory_space<vmem>>, vector<4x8xf32>,
    %15 = vector.extract_strided_slice %10 {offsets = [0, 8], sizes = [4, 8], strides = [1, 1]} : vector<4x64xf32> to vector<4x8xf32>
    %c0_21 = arith.constant 0 : index
    %c21 = arith.constant 21 : index
    %16 = vector.load %arg10[%c0_21, %c21] : memref<4x102xf32, #tpu.memory_space<vmem>>, vector<4x8xf32>
    tpu.vector_store %arg10[%c0_21, %c21], %15 {strides = array<i32>} : memref<4x102xf32, #tpu.memory_space<vmem>>, vector<4x8xf32>,
    %17 = vector.extract_strided_slice %10 {offsets = [0, 16], sizes = [4, 8], strides = [1, 1]} : vector<4x64xf32> to vector<4x8xf32>
    %c0_22 = arith.constant 0 : index
    %c31 = arith.constant 31 : index
    %18 = vector.load %arg10[%c0_22, %c31] : memref<4x102xf32, #tpu.memory_space<vmem>>, vector<4x8xf32>
    tpu.vector_store %arg10[%c0_22, %c31], %17 {strides = array<i32>} : memref<4x102xf32, #tpu.memory_space<vmem>>, vector<4x8xf32>,
    %19 = vector.extract_strided_slice %10 {offsets = [0, 24], sizes = [4, 8], strides = [1, 1]} : vector<4x64xf32> to vector<4x8xf32>
    %c0_23 = arith.constant 0 : index
    %c41 = arith.constant 41 : index
    %20 = vector.load %arg10[%c0_23, %c41] : memref<4x102xf32, #tpu.memory_space<vmem>>, vector<4x8xf32>
    tpu.vector_store %arg10[%c0_23, %c41], %19 {strides = array<i32>} : memref<4x102xf32, #tpu.memory_space<vmem>>, vector<4x8xf32>,
    %21 = vector.extract_strided_slice %10 {offsets = [0, 32], sizes = [4, 8], strides = [1, 1]} : vector<4x64xf32> to vector<4x8xf32>
    %c0_24 = arith.constant 0 : index
    %c51 = arith.constant 51 : index
    %22 = vector.load %arg10[%c0_24, %c51] : memref<4x102xf32, #tpu.memory_space<vmem>>, vector<4x8xf32>
    tpu.vector_store %arg10[%c0_24, %c51], %21 {strides = array<i32>} : memref<4x102xf32, #tpu.memory_space<vmem>>, vector<4x8xf32>,
    %23 = vector.extract_strided_slice %10 {offsets = [0, 40], sizes = [4, 8], strides = [1, 1]} : vector<4x64xf32> to vector<4x8xf32>
    %c0_25 = arith.constant 0 : index
    %c61 = arith.constant 61 : index
    %24 = vector.load %arg10[%c0_25, %c61] : memref<4x102xf32, #tpu.memory_space<vmem>>, vector<4x8xf32>
    tpu.vector_store %arg10[%c0_25, %c61], %23 {strides = array<i32>} : memref<4x102xf32, #tpu.memory_space<vmem>>, vector<4x8xf32>,
    %25 = vector.extract_strided_slice %10 {offsets = [0, 48], sizes = [4, 8], strides = [1, 1]} : vector<4x64xf32> to vector<4x8xf32>
    %c0_26 = arith.constant 0 : index
    %c71 = arith.constant 71 : index
    %26 = vector.load %arg10[%c0_26, %c71] : memref<4x102xf32, #tpu.memory_space<vmem>>, vector<4x8xf32>
    tpu.vector_store %arg10[%c0_26, %c71], %25 {strides = array<i32>} : memref<4x102xf32, #tpu.memory_space<vmem>>, vector<4x8xf32>,
    %27 = vector.extract_strided_slice %10 {offsets = [0, 56], sizes = [4, 8], strides = [1, 1]} : vector<4x64xf32> to vector<4x8xf32>
    %c0_27 = arith.constant 0 : index
    %c81 = arith.constant 81 : index
    %28 = vector.load %arg10[%c0_27, %c81] : memref<4x102xf32, #tpu.memory_space<vmem>>, vector<4x8xf32>
    tpu.vector_store %arg10[%c0_27, %c81], %27 {strides = array<i32>} : memref<4x102xf32, #tpu.memory_space<vmem>>, vector<4x8xf32>,
    %c0_28 = arith.constant 0 : index
    %c0_29 = arith.constant 0 : index
    %29 = vector.load %arg8[%c0_28, %c0_29] : memref<1x80xf32, #tpu.memory_space<vmem>>, vector<1x80xf32>
    %c0_30 = arith.constant 0 : index
    %c0_31 = arith.constant 0 : index
    %30 = vector.load %arg10[%c0_30, %c0_31] : memref<4x102xf32, #tpu.memory_space<vmem>>, vector<4x80xf32>
    %c0_32 = arith.constant 0 : index
    %c1_33 = arith.constant 1 : index
    %31 = vector.load %arg10[%c0_32, %c1_33] : memref<4x102xf32, #tpu.memory_space<vmem>>, vector<4x80xf32>
    %c0_34 = arith.constant 0 : index
    %c2 = arith.constant 2 : index
    %32 = vector.load %arg10[%c0_34, %c2] : memref<4x102xf32, #tpu.memory_space<vmem>>, vector<4x80xf32>
    %c0_35 = arith.constant 0 : index
    %c10 = arith.constant 10 : index
    %33 = vector.load %arg10[%c0_35, %c10] : memref<4x102xf32, #tpu.memory_space<vmem>>, vector<4x80xf32>
    %c0_36 = arith.constant 0 : index
    %c11_37 = arith.constant 11 : index
    %34 = vector.load %arg10[%c0_36, %c11_37] : memref<4x102xf32, #tpu.memory_space<vmem>>, vector<4x80xf32>
    %c0_38 = arith.constant 0 : index
    %c12 = arith.constant 12 : index
    %35 = vector.load %arg10[%c0_38, %c12] : memref<4x102xf32, #tpu.memory_space<vmem>>, vector<4x80xf32>
    %c0_39 = arith.constant 0 : index
    %c20 = arith.constant 20 : index
    %36 = vector.load %arg10[%c0_39, %c20] : memref<4x102xf32, #tpu.memory_space<vmem>>, vector<4x80xf32>
    %c0_40 = arith.constant 0 : index
    %c21_41 = arith.constant 21 : index
    %37 = vector.load %arg10[%c0_40, %c21_41] : memref<4x102xf32, #tpu.memory_space<vmem>>, vector<4x80xf32>
    %c0_42 = arith.constant 0 : index
    %c22 = arith.constant 22 : index
    %38 = vector.load %arg10[%c0_42, %c22] : memref<4x102xf32, #tpu.memory_space<vmem>>, vector<4x80xf32>
    %39 = tpu.concatenate %30, %31, %32, %33, %34, %35, %36, %37, %38 in 0 : vector<4x80xf32>, vector<4x80xf32>, vector<4x80xf32>, vector<4x80xf32>, vector<4x80xf32>, vector<4x80xf32>, vector<4x80xf32>, vector<4x80xf32>, vector<4x80xf32> -> vector<36x80xf32>
    %c0_43 = arith.constant 0 : index
    %c0_44 = arith.constant 0 : index
    %40 = vector.load %arg2[%c0_43, %c0_44] : memref<8x36xf32, #tpu.memory_space<vmem>>, vector<8x36xf32>
    %cst_45 = arith.constant dense<0.000000e+00> : vector<8x80xf32>
    %41 = tpu.matmul %40, %39, %cst_45 {dimension_numbers = #tpu.dot_dimension_numbers<[1], [0], [0], [1], [0, 0, 1, 1], [], []>} : vector<8x36xf32>, vector<36x80xf32>, vector<8x80xf32> -> vector<8x80xf32>
    %c0_46 = arith.constant 0 : index
    %c0_47 = arith.constant 0 : index
    %42 = vector.load %arg3[%c0_46, %c0_47] : memref<8x1xf32, #tpu.memory_space<vmem>>, vector<8x1xf32>
    %43 = vector.broadcast %42 : vector<8x1xf32> to vector<8x80xf32>
    %44 = arith.mulf %41, %43 : vector<8x80xf32>
    %c0_48 = arith.constant 0 : index
    %c0_49 = arith.constant 0 : index
    %45 = vector.load %arg4[%c0_48, %c0_49] : memref<8x1xf32, #tpu.memory_space<vmem>>, vector<8x1xf32>
    %46 = vector.broadcast %45 : vector<8x1xf32> to vector<8x80xf32>
    %47 = arith.addf %44, %46 : vector<8x80xf32>
    %cst_50 = arith.constant 0.000000e+00 : f32
    %48 = vector.broadcast %cst_50 : f32 to vector<8x80xf32>
    %49 = arith.maximumf %47, %48 : vector<8x80xf32>
    %cst_51 = arith.constant 0.000000e+00 : f32
    %50 = vector.broadcast %cst_51 : f32 to vector<8x102xf32>
    %c0_52 = arith.constant 0 : index
    %c0_53 = arith.constant 0 : index
    %51 = vector.load %arg11[%c0_52, %c0_53] : memref<8x102xf32, #tpu.memory_space<vmem>>, vector<8x102xf32>
    tpu.vector_store %arg11[%c0_52, %c0_53], %50 {strides = array<i32>} : memref<8x102xf32, #tpu.memory_space<vmem>>, vector<8x102xf32>,
    %52 = vector.broadcast %29 : vector<1x80xf32> to vector<8x80xf32>
    %53 = arith.mulf %49, %52 : vector<8x80xf32>
    %c0_54 = arith.constant 0 : index
    %c11_55 = arith.constant 11 : index
    %54 = vector.load %arg11[%c0_54, %c11_55] : memref<8x102xf32, #tpu.memory_space<vmem>>, vector<8x80xf32>
    tpu.vector_store %arg11[%c0_54, %c11_55], %53 {strides = array<i32>} : memref<8x102xf32, #tpu.memory_space<vmem>>, vector<8x80xf32>,
    %c0_56 = arith.constant 0 : index
    %c0_57 = arith.constant 0 : index
    %55 = vector.load %arg11[%c0_56, %c0_57] : memref<8x102xf32, #tpu.memory_space<vmem>>, vector<8x80xf32>
    %c0_58 = arith.constant 0 : index
    %c1_59 = arith.constant 1 : index
    %56 = vector.load %arg11[%c0_58, %c1_59] : memref<8x102xf32, #tpu.memory_space<vmem>>, vector<8x80xf32>
    %c0_60 = arith.constant 0 : index
    %c2_61 = arith.constant 2 : index
    %57 = vector.load %arg11[%c0_60, %c2_61] : memref<8x102xf32, #tpu.memory_space<vmem>>, vector<8x80xf32>
    %c0_62 = arith.constant 0 : index
    %c10_63 = arith.constant 10 : index
    %58 = vector.load %arg11[%c0_62, %c10_63] : memref<8x102xf32, #tpu.memory_space<vmem>>, vector<8x80xf32>
    %c0_64 = arith.constant 0 : index
    %c11_65 = arith.constant 11 : index
    %59 = vector.load %arg11[%c0_64, %c11_65] : memref<8x102xf32, #tpu.memory_space<vmem>>, vector<8x80xf32>
    %c0_66 = arith.constant 0 : index
    %c12_67 = arith.constant 12 : index
    %60 = vector.load %arg11[%c0_66, %c12_67] : memref<8x102xf32, #tpu.memory_space<vmem>>, vector<8x80xf32>
    %c0_68 = arith.constant 0 : index
    %c20_69 = arith.constant 20 : index
    %61 = vector.load %arg11[%c0_68, %c20_69] : memref<8x102xf32, #tpu.memory_space<vmem>>, vector<8x80xf32>
    %c0_70 = arith.constant 0 : index
    %c21_71 = arith.constant 21 : index
    %62 = vector.load %arg11[%c0_70, %c21_71] : memref<8x102xf32, #tpu.memory_space<vmem>>, vector<8x80xf32>
    %c0_72 = arith.constant 0 : index
    %c22_73 = arith.constant 22 : index
    %63 = vector.load %arg11[%c0_72, %c22_73] : memref<8x102xf32, #tpu.memory_space<vmem>>, vector<8x80xf32>
    %64 = tpu.concatenate %55, %56, %57, %58, %59, %60, %61, %62, %63 in 0 : vector<8x80xf32>, vector<8x80xf32>, vector<8x80xf32>, vector<8x80xf32>, vector<8x80xf32>, vector<8x80xf32>, vector<8x80xf32>, vector<8x80xf32>, vector<8x80xf32> -> vector<72x80xf32>
    %c0_74 = arith.constant 0 : index
    %c0_75 = arith.constant 0 : index
    %65 = vector.load %arg5[%c0_74, %c0_75] : memref<8x72xf32, #tpu.memory_space<vmem>>, vector<8x72xf32>
    %cst_76 = arith.constant dense<0.000000e+00> : vector<8x80xf32>
    %66 = tpu.matmul %65, %64, %cst_76 {dimension_numbers = #tpu.dot_dimension_numbers<[1], [0], [0], [1], [0, 0, 1, 1], [], []>} : vector<8x72xf32>, vector<72x80xf32>, vector<8x80xf32> -> vector<8x80xf32>
    %c0_77 = arith.constant 0 : index
    %c0_78 = arith.constant 0 : index
    %67 = vector.load %arg6[%c0_77, %c0_78] : memref<8x1xf32, #tpu.memory_space<vmem>>, vector<8x1xf32>
    %68 = vector.broadcast %67 : vector<8x1xf32> to vector<8x80xf32>
    %69 = arith.mulf %66, %68 : vector<8x80xf32>
    %c0_79 = arith.constant 0 : index
    %c0_80 = arith.constant 0 : index
    %70 = vector.load %arg7[%c0_79, %c0_80] : memref<8x1xf32, #tpu.memory_space<vmem>>, vector<8x1xf32>
    %71 = vector.broadcast %70 : vector<8x1xf32> to vector<8x80xf32>
    %72 = arith.addf %69, %71 : vector<8x80xf32>
    %cst_81 = arith.constant 0.000000e+00 : f32
    %73 = vector.broadcast %cst_81 : f32 to vector<8x80xf32>
    %74 = arith.maximumf %72, %73 : vector<8x80xf32>
    %75 = vector.extract_strided_slice %74 {offsets = [0, 0], sizes = [8, 8], strides = [1, 1]} : vector<8x80xf32> to vector<8x8xf32>
    %c0_82 = arith.constant 0 : index
    %c0_83 = arith.constant 0 : index
    %c0_84 = arith.constant 0 : index
    %76 = vector.load %arg9[%c0_82, %c0_83, %c0_84] : memref<1x8x64xf32, #tpu.memory_space<vmem>>, vector<1x8x8xf32>
    %77 = vector.shape_cast %76 : vector<1x8x8xf32> to vector<8x8xf32>
    %78 = vector.shape_cast %75 : vector<8x8xf32> to vector<1x8x8xf32>
    tpu.vector_store %arg9[%c0_82, %c0_83, %c0_84], %78 {strides = array<i32>} : memref<1x8x64xf32, #tpu.memory_space<vmem>>, vector<1x8x8xf32>,
    %79 = vector.extract_strided_slice %74 {offsets = [0, 10], sizes = [8, 8], strides = [1, 1]} : vector<8x80xf32> to vector<8x8xf32>
    %c0_85 = arith.constant 0 : index
    %c0_86 = arith.constant 0 : index
    %c8 = arith.constant 8 : index
    %80 = vector.load %arg9[%c0_85, %c0_86, %c8] : memref<1x8x64xf32, #tpu.memory_space<vmem>>, vector<1x8x8xf32>
    %81 = vector.shape_cast %80 : vector<1x8x8xf32> to vector<8x8xf32>
    %82 = vector.shape_cast %79 : vector<8x8xf32> to vector<1x8x8xf32>
    tpu.vector_store %arg9[%c0_85, %c0_86, %c8], %82 {strides = array<i32>} : memref<1x8x64xf32, #tpu.memory_space<vmem>>, vector<1x8x8xf32>,
    %83 = vector.extract_strided_slice %74 {offsets = [0, 20], sizes = [8, 8], strides = [1, 1]} : vector<8x80xf32> to vector<8x8xf32>
    %c0_87 = arith.constant 0 : index
    %c0_88 = arith.constant 0 : index
    %c16 = arith.constant 16 : index
    %84 = vector.load %arg9[%c0_87, %c0_88, %c16] : memref<1x8x64xf32, #tpu.memory_space<vmem>>, vector<1x8x8xf32>
    %85 = vector.shape_cast %84 : vector<1x8x8xf32> to vector<8x8xf32>
    %86 = vector.shape_cast %83 : vector<8x8xf32> to vector<1x8x8xf32>
    tpu.vector_store %arg9[%c0_87, %c0_88, %c16], %86 {strides = array<i32>} : memref<1x8x64xf32, #tpu.memory_space<vmem>>, vector<1x8x8xf32>,
    %87 = vector.extract_strided_slice %74 {offsets = [0, 30], sizes = [8, 8], strides = [1, 1]} : vector<8x80xf32> to vector<8x8xf32>
    %c0_89 = arith.constant 0 : index
    %c0_90 = arith.constant 0 : index
    %c24 = arith.constant 24 : index
    %88 = vector.load %arg9[%c0_89, %c0_90, %c24] : memref<1x8x64xf32, #tpu.memory_space<vmem>>, vector<1x8x8xf32>
    %89 = vector.shape_cast %88 : vector<1x8x8xf32> to vector<8x8xf32>
    %90 = vector.shape_cast %87 : vector<8x8xf32> to vector<1x8x8xf32>
    tpu.vector_store %arg9[%c0_89, %c0_90, %c24], %90 {strides = array<i32>} : memref<1x8x64xf32, #tpu.memory_space<vmem>>, vector<1x8x8xf32>,
    %91 = vector.extract_strided_slice %74 {offsets = [0, 40], sizes = [8, 8], strides = [1, 1]} : vector<8x80xf32> to vector<8x8xf32>
    %c0_91 = arith.constant 0 : index
    %c0_92 = arith.constant 0 : index
    %c32 = arith.constant 32 : index
    %92 = vector.load %arg9[%c0_91, %c0_92, %c32] : memref<1x8x64xf32, #tpu.memory_space<vmem>>, vector<1x8x8xf32>
    %93 = vector.shape_cast %92 : vector<1x8x8xf32> to vector<8x8xf32>
    %94 = vector.shape_cast %91 : vector<8x8xf32> to vector<1x8x8xf32>
    tpu.vector_store %arg9[%c0_91, %c0_92, %c32], %94 {strides = array<i32>} : memref<1x8x64xf32, #tpu.memory_space<vmem>>, vector<1x8x8xf32>,
    %95 = vector.extract_strided_slice %74 {offsets = [0, 50], sizes = [8, 8], strides = [1, 1]} : vector<8x80xf32> to vector<8x8xf32>
    %c0_93 = arith.constant 0 : index
    %c0_94 = arith.constant 0 : index
    %c40 = arith.constant 40 : index
    %96 = vector.load %arg9[%c0_93, %c0_94, %c40] : memref<1x8x64xf32, #tpu.memory_space<vmem>>, vector<1x8x8xf32>
    %97 = vector.shape_cast %96 : vector<1x8x8xf32> to vector<8x8xf32>
    %98 = vector.shape_cast %95 : vector<8x8xf32> to vector<1x8x8xf32>
    tpu.vector_store %arg9[%c0_93, %c0_94, %c40], %98 {strides = array<i32>} : memref<1x8x64xf32, #tpu.memory_space<vmem>>, vector<1x8x8xf32>,
    %99 = vector.extract_strided_slice %74 {offsets = [0, 60], sizes = [8, 8], strides = [1, 1]} : vector<8x80xf32> to vector<8x8xf32>
    %c0_95 = arith.constant 0 : index
    %c0_96 = arith.constant 0 : index
    %c48 = arith.constant 48 : index
    %100 = vector.load %arg9[%c0_95, %c0_96, %c48] : memref<1x8x64xf32, #tpu.memory_space<vmem>>, vector<1x8x8xf32>
    %101 = vector.shape_cast %100 : vector<1x8x8xf32> to vector<8x8xf32>
    %102 = vector.shape_cast %99 : vector<8x8xf32> to vector<1x8x8xf32>
    tpu.vector_store %arg9[%c0_95, %c0_96, %c48], %102 {strides = array<i32>} : memref<1x8x64xf32, #tpu.memory_space<vmem>>, vector<1x8x8xf32>,
    %103 = vector.extract_strided_slice %74 {offsets = [0, 70], sizes = [8, 8], strides = [1, 1]} : vector<8x80xf32> to vector<8x8xf32>
    %c0_97 = arith.constant 0 : index
    %c0_98 = arith.constant 0 : index
    %c56 = arith.constant 56 : index
    %104 = vector.load %arg9[%c0_97, %c0_98, %c56] : memref<1x8x64xf32, #tpu.memory_space<vmem>>, vector<1x8x8xf32>
    %105 = vector.shape_cast %104 : vector<1x8x8xf32> to vector<8x8xf32>
    %106 = vector.shape_cast %103 : vector<8x8xf32> to vector<1x8x8xf32>
    tpu.vector_store %arg9[%c0_97, %c0_98, %c56], %106 {strides = array<i32>} : memref<1x8x64xf32, #tpu.memory_space<vmem>>, vector<1x8x8xf32>,
    return
  }
  func.func @transform_0(%arg0: i32) -> (i32, i32, i32, i32, i32) {
    %c0_i32 = arith.constant 0 : i32
    %c0_i32_0 = arith.constant 0 : i32
    %c0_i32_1 = arith.constant 0 : i32
    %c0_i32_2 = arith.constant 0 : i32
    %c0_i32_3 = arith.constant 0 : i32
    return %arg0, %c0_i32, %c0_i32_0, %c0_i32_1, %c0_i32_2 : i32, i32, i32, i32, i32
  }
  func.func @transform_1(%arg0: i32) -> (i32, i32) {
    %c0_i32 = arith.constant 0 : i32
    %c0_i32_0 = arith.constant 0 : i32
    %c0_i32_1 = arith.constant 0 : i32
    return %c0_i32, %c0_i32_0 : i32, i32
  }
  func.func @transform_2(%arg0: i32) -> (i32, i32) {
    %c0_i32 = arith.constant 0 : i32
    %c0_i32_0 = arith.constant 0 : i32
    %c0_i32_1 = arith.constant 0 : i32
    return %c0_i32, %c0_i32_0 : i32, i32
  }
  func.func @transform_3(%arg0: i32) -> (i32, i32) {
    %c0_i32 = arith.constant 0 : i32
    %c0_i32_0 = arith.constant 0 : i32
    %c0_i32_1 = arith.constant 0 : i32
    return %c0_i32, %c0_i32_0 : i32, i32
  }
  func.func @transform_4(%arg0: i32) -> (i32, i32) {
    %c0_i32 = arith.constant 0 : i32
    %c0_i32_0 = arith.constant 0 : i32
    %c0_i32_1 = arith.constant 0 : i32
    return %c0_i32, %c0_i32_0 : i32, i32
  }
  func.func @transform_5(%arg0: i32) -> (i32, i32) {
    %c0_i32 = arith.constant 0 : i32
    %c0_i32_0 = arith.constant 0 : i32
    %c0_i32_1 = arith.constant 0 : i32
    return %c0_i32, %c0_i32_0 : i32, i32
  }
  func.func @transform_6(%arg0: i32) -> (i32, i32) {
    %c0_i32 = arith.constant 0 : i32
    %c0_i32_0 = arith.constant 0 : i32
    %c0_i32_1 = arith.constant 0 : i32
    return %c0_i32, %c0_i32_0 : i32, i32
  }
  func.func @transform_7(%arg0: i32) -> (i32, i32) {
    %c0_i32 = arith.constant 0 : i32
    %c0_i32_0 = arith.constant 0 : i32
    %c0_i32_1 = arith.constant 0 : i32
    return %c0_i32, %c0_i32_0 : i32, i32
  }
  func.func @transform_8(%arg0: i32) -> (i32, i32, i32) {
    %c0_i32 = arith.constant 0 : i32
    %c0_i32_0 = arith.constant 0 : i32
    %c0_i32_1 = arith.constant 0 : i32
    return %arg0, %c0_i32, %c0_i32_0 : i32, i32, i32
  }
}

</mosaic_0001>

<llo_original>
// kernel: tpu_custom_call.1
$region0: #{tpu_custom_call.1}
  #allocation0 [shape = 'u32[]', space=smem, size = 0x4, offset = 0x4, fixed_abs, tag = 'smem constant byte address 0x4 - core index']
  #allocation1 [shape = 'u32[144,128]{1,0:T(1,128)}', space=vmem, size = 0x12000, scoped, tag = 'internal scratch']
  #allocation2 [shape = 'f32[4,102]{1,0:T(4,128)}', space=vmem, size = 0x800, scoped, tag = 'scratch operand']
  #allocation3 [shape = 'f32[8,102]{1,0:T(8,128)}', space=vmem, size = 0x1000, scoped, tag = 'scratch operand']
  %s0 = inlined_call_operand.vmem [shape: f32[2,2,2,4,64], index: 0, kind: input, shape index: {}]
  %s1 = inlined_call_operand.hbm [shape: f32[8,36], index: 1, kind: input, shape index: {}]
  %s2 = inlined_call_operand.vmem [shape: f32[8,1], index: 2, kind: input, shape index: {}]
  %s3 = inlined_call_operand.vmem [shape: f32[8,1], index: 3, kind: input, shape index: {}]
  %s4 = inlined_call_operand.vmem [shape: f32[8,72], index: 4, kind: input, shape index: {}]
  %s5 = inlined_call_operand.vmem [shape: f32[8,1], index: 5, kind: input, shape index: {}]
  %s6 = inlined_call_operand.vmem [shape: f32[8,1], index: 6, kind: input, shape index: {}]
  %s7 = inlined_call_operand.vmem [shape: f32[1,80], index: 7, kind: input, shape index: {}]
  %s8 = inlined_call_operand.hbm [shape: f32[2,8,64], index: 8, kind: output, shape index: {}]
  %s9 = sld [smem:[#allocation0]]
  $region69: #{tpu_custom_call.1} parent=0
    _
  %s11 = ssub.s32 1, %s9
  %s12 = scalar_select 0, %s11, %s9
  $region1: #{tpu_custom_call.1} parent=0
    #allocation4 [shape = 'u8[4096]{0}', space=vmem, size = 0x1000, scoped, tag = 'input window, operand 1, single buffered']
    #allocation5 [shape = 's32[2]{0}', space=sflag, size = 0x8, scoped, tag = 'scoped memory for tpu_custom_call.1']
    #allocation6 [shape = 's32[2]{0}', space=sflag, size = 0x8, scoped, tag = 'scoped memory for tpu_custom_call.1']
    #allocation7 [shape = 'u8[8192]{0}', space=vmem, size = 0x2000, scoped, tag = 'output window, operand 0']
    %13 = vsyncpa [#allocation5], 0
    %14 = vsyncpa [#allocation6], 0
    %s15 = scalar_lea.sflag [#allocation6], 1
    %16 = vsyncpa %s15, 0
    loop: start=0, step=1, limit=4
    $region2: #{tpu_custom_call.1} parent=1 // loop_pre_header
      _
    $region3: #{tpu_custom_call.1} parent=1 // loop_header
      %s18 = sphi 0, %s22
      %p19 = scmp.ge.s32.totalorder %s18, 4
      %s28 = sphi 0, %s30
      %s31 = sphi 0, %s28
      %s32 = sphi 0, %s31
      %s48 = sphi 0, %s32
      %s52 = sphi 0, %s52
      %s54 = sphi 0, %s52
      %s55 = sphi 0, %s54
      %s69 = sphi 0, %s55
      %s73 = sphi 0, %s73
      %s75 = sphi 0, %s73
      %s76 = sphi 0, %s75
      %s90 = sphi 0, %s76
      %s94 = sphi 0, %s94
      %s96 = sphi 0, %s94
      %s97 = sphi 0, %s96
      %s111 = sphi 0, %s97
      %s115 = sphi 0, %s115
      %s117 = sphi 0, %s115
      %s118 = sphi 0, %s117
      %s132 = sphi 0, %s118
      %s136 = sphi 0, %s136
      %s138 = sphi 0, %s136
      %s139 = sphi 0, %s138
      %s153 = sphi 0, %s139
      %s157 = sphi 0, %s157
      %s159 = sphi 0, %s157
      %s160 = sphi 0, %s159
      %s174 = sphi 0, %s160
      %s178 = sphi 0, %s178
      %s180 = sphi 0, %s178
      %s181 = sphi 0, %s180
      %s195 = sphi 0, %s181
      %s201 = sphi 0, %s203
      %s204 = sphi 0, %s201
      %s205 = sphi 0, %s204
      %s221 = sphi 0, %s205
    $region4: #{tpu_custom_call.1} parent=1 // loop_header_branch
      %21 = sbr.rel (%p19) target = $region8
    $region5: #{tpu_custom_call.1} parent=1 // loop_body
      %s23 = ssub.s32 %s18, 1
      %s24 = ssub.s32 %s18, 2
      %s25 = sadd.s32 %s18, 1
      %s26 = ssub.s32 %s18, %s25
      %p27 = scmp.eq.s32.totalorder %s26, 0
      %s29 = sadd.s32 %s28, 1
      %s30 = scalar_select %p27, %s28, %s29
      %p33 = pneg %p27
      %p34 = scmp.eq.s32.totalorder %s18, 1
      %p35 = por %p33, %p34
      %p36 = scmp.ne.s32.totalorder %s28, %s31
      %p37 = scmp.eq.s32.totalorder %s18, 0
      %p38 = por %p36, %p37
      %p39 = scmp.ne.s32.totalorder %s28, %s31
      %p40 = scmp.eq.s32.totalorder %s23, 1
      %p41 = por %p39, %p40
      %p42 = scmp.ne.s32.totalorder %s31, %s32
      %p43 = scmp.eq.s32.totalorder %s23, 0
      %p44 = por %p42, %p43
      %p45 = scmp.ne.s32.totalorder %s31, %s32
      %p46 = scmp.eq.s32.totalorder %s24, 1
      %p47 = por %p45, %p46
      %p49 = scmp.ne.s32.totalorder %s32, %s48
      %p50 = scmp.eq.s32.totalorder %s24, 0
      %p51 = por %p49, %p50
      %s53 = sadd.s32 %s52, 1
      %p56 = scmp.eq.s32.totalorder %s18, 1
      %p57 = scmp.ne.s32.totalorder %s52, %s54
      %p58 = scmp.eq.s32.totalorder %s18, 0
      %p59 = por %p57, %p58
      %p60 = scmp.ne.s32.totalorder %s52, %s54
      %p61 = scmp.eq.s32.totalorder %s23, 1
      %p62 = por %p60, %p61
      %p63 = scmp.ne.s32.totalorder %s54, %s55
      %p64 = scmp.eq.s32.totalorder %s23, 0
      %p65 = por %p63, %p64
      %p66 = scmp.ne.s32.totalorder %s54, %s55
      %p67 = scmp.eq.s32.totalorder %s24, 1
      %p68 = por %p66, %p67
      %p70 = scmp.ne.s32.totalorder %s55, %s69
      %p71 = scmp.eq.s32.totalorder %s24, 0
      %p72 = por %p70, %p71
      %s74 = sadd.s32 %s73, 1
      %p77 = scmp.eq.s32.totalorder %s18, 1
      %p78 = scmp.ne.s32.totalorder %s73, %s75
      %p79 = scmp.eq.s32.totalorder %s18, 0
      %p80 = por %p78, %p79
      %p81 = scmp.ne.s32.totalorder %s73, %s75
      %p82 = scmp.eq.s32.totalorder %s23, 1
      %p83 = por %p81, %p82
      %p84 = scmp.ne.s32.totalorder %s75, %s76
      %p85 = scmp.eq.s32.totalorder %s23, 0
      %p86 = por %p84, %p85
      %p87 = scmp.ne.s32.totalorder %s75, %s76
      %p88 = scmp.eq.s32.totalorder %s24, 1
      %p89 = por %p87, %p88
      %p91 = scmp.ne.s32.totalorder %s76, %s90
      %p92 = scmp.eq.s32.totalorder %s24, 0
      %p93 = por %p91, %p92
      %s95 = sadd.s32 %s94, 1
      %p98 = scmp.eq.s32.totalorder %s18, 1
      %p99 = scmp.ne.s32.totalorder %s94, %s96
      %p100 = scmp.eq.s32.totalorder %s18, 0
      %p101 = por %p99, %p100
      %p102 = scmp.ne.s32.totalorder %s94, %s96
      %p103 = scmp.eq.s32.totalorder %s23, 1
      %p104 = por %p102, %p103
      %p105 = scmp.ne.s32.totalorder %s96, %s97
      %p106 = scmp.eq.s32.totalorder %s23, 0
      %p107 = por %p105, %p106
      %p108 = scmp.ne.s32.totalorder %s96, %s97
      %p109 = scmp.eq.s32.totalorder %s24, 1
      %p110 = por %p108, %p109
      %p112 = scmp.ne.s32.totalorder %s97, %s111
      %p113 = scmp.eq.s32.totalorder %s24, 0
      %p114 = por %p112, %p113
      %s116 = sadd.s32 %s115, 1
      %p119 = scmp.eq.s32.totalorder %s18, 1
      %p120 = scmp.ne.s32.totalorder %s115, %s117
      %p121 = scmp.eq.s32.totalorder %s18, 0
      %p122 = por %p120, %p121
      %p123 = scmp.ne.s32.totalorder %s115, %s117
      %p124 = scmp.eq.s32.totalorder %s23, 1
      %p125 = por %p123, %p124
      %p126 = scmp.ne.s32.totalorder %s117, %s118
      %p127 = scmp.eq.s32.totalorder %s23, 0
      %p128 = por %p126, %p127
      %p129 = scmp.ne.s32.totalorder %s117, %s118
      %p130 = scmp.eq.s32.totalorder %s24, 1
      %p131 = por %p129, %p130
      %p133 = scmp.ne.s32.totalorder %s118, %s132
      %p134 = scmp.eq.s32.totalorder %s24, 0
      %p135 = por %p133, %p134
      %s137 = sadd.s32 %s136, 1
      %p140 = scmp.eq.s32.totalorder %s18, 1
      %p141 = scmp.ne.s32.totalorder %s136, %s138
      %p142 = scmp.eq.s32.totalorder %s18, 0
      %p143 = por %p141, %p142
      %p144 = scmp.ne.s32.totalorder %s136, %s138
      %p145 = scmp.eq.s32.totalorder %s23, 1
      %p146 = por %p144, %p145
      %p147 = scmp.ne.s32.totalorder %s138, %s139
      %p148 = scmp.eq.s32.totalorder %s23, 0
      %p149 = por %p147, %p148
      %p150 = scmp.ne.s32.totalorder %s138, %s139
      %p151 = scmp.eq.s32.totalorder %s24, 1
      %p152 = por %p150, %p151
      %p154 = scmp.ne.s32.totalorder %s139, %s153
      %p155 = scmp.eq.s32.totalorder %s24, 0
      %p156 = por %p154, %p155
      %s158 = sadd.s32 %s157, 1
      %p161 = scmp.eq.s32.totalorder %s18, 1
      %p162 = scmp.ne.s32.totalorder %s157, %s159
      %p163 = scmp.eq.s32.totalorder %s18, 0
      %p164 = por %p162, %p163
      %p165 = scmp.ne.s32.totalorder %s157, %s159
      %p166 = scmp.eq.s32.totalorder %s23, 1
      %p167 = por %p165, %p166
      %p168 = scmp.ne.s32.totalorder %s159, %s160
      %p169 = scmp.eq.s32.totalorder %s23, 0
      %p170 = por %p168, %p169
      %p171 = scmp.ne.s32.totalorder %s159, %s160
      %p172 = scmp.eq.s32.totalorder %s24, 1
      %p173 = por %p171, %p172
      %p175 = scmp.ne.s32.totalorder %s160, %s174
      %p176 = scmp.eq.s32.totalorder %s24, 0
      %p177 = por %p175, %p176
      %s179 = sadd.s32 %s178, 1
      %p182 = scmp.eq.s32.totalorder %s18, 1
      %p183 = scmp.ne.s32.totalorder %s178, %s180
      %p184 = scmp.eq.s32.totalorder %s18, 0
      %p185 = por %p183, %p184
      %p186 = scmp.ne.s32.totalorder %s178, %s180
      %p187 = scmp.eq.s32.totalorder %s23, 1
      %p188 = por %p186, %p187
      %p189 = scmp.ne.s32.totalorder %s180, %s181
      %p190 = scmp.eq.s32.totalorder %s23, 0
      %p191 = por %p189, %p190
      %p192 = scmp.ne.s32.totalorder %s180, %s181
      %p193 = scmp.eq.s32.totalorder %s24, 1
      %p194 = por %p192, %p193
      %p196 = scmp.ne.s32.totalorder %s181, %s195
      %p197 = scmp.eq.s32.totalorder %s24, 0
      %p198 = por %p196, %p197
      %s199 = ssub.s32 %s18, %s25
      %p200 = scmp.eq.s32.totalorder %s199, 0
      %s202 = sadd.s32 %s201, 1
      %s203 = scalar_select %p200, %s201, %s202
      %p206 = pneg %p200
      %p207 = scmp.eq.s32.totalorder %s18, 1
      %p208 = por %p206, %p207
      %p209 = scmp.ne.s32.totalorder %s201, %s204
      %p210 = scmp.eq.s32.totalorder %s18, 0
      %p211 = por %p209, %p210
      %p212 = scmp.ne.s32.totalorder %s201, %s204
      %p213 = scmp.eq.s32.totalorder %s23, 1
      %p214 = por %p212, %p213
      %p215 = scmp.ne.s32.totalorder %s204, %s205
      %p216 = scmp.eq.s32.totalorder %s23, 0
      %p217 = por %p215, %p216
      %p218 = scmp.ne.s32.totalorder %s204, %s205
      %p219 = scmp.eq.s32.totalorder %s24, 1
      %p220 = por %p218, %p219
      %p222 = scmp.ne.s32.totalorder %s205, %s221
      %p223 = scmp.eq.s32.totalorder %s24, 0
      %p224 = por %p222, %p223
      %p225 = scmp.le.s32.totalorder 1, %s18
      %p226 = scmp.lt.s32.totalorder %s18, 3
      %p227 = pnand %p225, %p226
      %p228 = pneg %p227
      // Predicated region
      $region9: #{tpu_custom_call.1} parent=5 // pred_check
        _
      $region10: #{tpu_custom_call.1} parent=5 // pred_check_branch
        %230 = sbr.rel (%p227) target = $region12
      $region11: #{tpu_custom_call.1} parent=5 // pred_region
        %s231 = ssub.s32 %s18, 1
        // Predicated region
        $region13: #{tpu_custom_call.1} parent=11 // pred_check
          %p232 = pneg %p65
        $region14: #{tpu_custom_call.1} parent=11 // pred_check_branch
          %234 = sbr.rel (%p232) target = $region16
        $region15: #{tpu_custom_call.1} parent=11 // pred_region
          %s236 = ssub.s32 128, 128
          %237 = vsyncadd [#allocation5], %s236
          %s239 = sshll.u32 [#allocation4], 4
          %s240 = int_to_ptr.vmem [resolvable:$true] %s239
          %242 = dma.hbm_to_vmem [thread:$0]  %s1, 128, %s240, [#allocation5]
        $region16: #{tpu_custom_call.1} parent=11 // pred_fallthru
          _
        // Predicated region
        $region17: #{tpu_custom_call.1} parent=11 // pred_check
          %p243 = pneg %p86
        $region18: #{tpu_custom_call.1} parent=11 // pred_check_branch
          %245 = sbr.rel (%p243) target = $region20
        $region19: #{tpu_custom_call.1} parent=11 // pred_region
          _
        $region20: #{tpu_custom_call.1} parent=11 // pred_fallthru
          _
        // Predicated region
        $region21: #{tpu_custom_call.1} parent=11 // pred_check
          %p246 = pneg %p107
        $region22: #{tpu_custom_call.1} parent=11 // pred_check_branch
          %248 = sbr.rel (%p246) target = $region24
        $region23: #{tpu_custom_call.1} parent=11 // pred_region
          _
        $region24: #{tpu_custom_call.1} parent=11 // pred_fallthru
          _
        // Predicated region
        $region25: #{tpu_custom_call.1} parent=11 // pred_check
          %p249 = pneg %p128
        $region26: #{tpu_custom_call.1} parent=11 // pred_check_branch
          %251 = sbr.rel (%p249) target = $region28
        $region27: #{tpu_custom_call.1} parent=11 // pred_region
          _
        $region28: #{tpu_custom_call.1} parent=11 // pred_fallthru
          _
        // Predicated region
        $region29: #{tpu_custom_call.1} parent=11 // pred_check
          %p252 = pneg %p149
        $region30: #{tpu_custom_call.1} parent=11 // pred_check_branch
          %254 = sbr.rel (%p252) target = $region32
        $region31: #{tpu_custom_call.1} parent=11 // pred_region
          _
        $region32: #{tpu_custom_call.1} parent=11 // pred_fallthru
          _
        // Predicated region
        $region33: #{tpu_custom_call.1} parent=11 // pred_check
          %p255 = pneg %p170
        $region34: #{tpu_custom_call.1} parent=11 // pred_check_branch
          %257 = sbr.rel (%p255) target = $region36
        $region35: #{tpu_custom_call.1} parent=11 // pred_region
          _
        $region36: #{tpu_custom_call.1} parent=11 // pred_fallthru
          _
        // Predicated region
        $region37: #{tpu_custom_call.1} parent=11 // pred_check
          %p258 = pneg %p191
        $region38: #{tpu_custom_call.1} parent=11 // pred_check_branch
          %260 = sbr.rel (%p258) target = $region40
        $region39: #{tpu_custom_call.1} parent=11 // pred_region
          _
        $region40: #{tpu_custom_call.1} parent=11 // pred_fallthru
          _
      $region12: #{tpu_custom_call.1} parent=5 // pred_fallthru
        _
      %p261 = scmp.lt.s32.totalorder %s18, 2
      // Predicated region
      $region41: #{tpu_custom_call.1} parent=5 // pred_check
        %p262 = pneg %p261
      $region42: #{tpu_custom_call.1} parent=5 // pred_check_branch
        %264 = sbr.rel (%p262) target = $region44
      $region43: #{tpu_custom_call.1} parent=5 // pred_region
        // Predicated region
        $region45: #{tpu_custom_call.1} parent=43 // pred_check
          %p265 = pneg %p38
        $region46: #{tpu_custom_call.1} parent=43 // pred_check_branch
          %267 = sbr.rel (%p265) target = $region48
        $region47: #{tpu_custom_call.1} parent=43 // pred_region
          %p268 = scmp.lt.s32.totalorder %s18, 1
          %s269 = scalar_select %p268, %s18, 1
          %s270 = smul.addr %s269, 4
          %s271 = smul.addr %s270, 4
          %s272 = scalar_lea.vmem %s0, %s271
        $region48: #{tpu_custom_call.1} parent=43 // pred_fallthru
          _
      $region44: #{tpu_custom_call.1} parent=5 // pred_fallthru
        _
      %p273 = scmp.le.s32.totalorder 1, %s18
      %p274 = scmp.lt.s32.totalorder %s18, 3
      %p275 = pnand %p273, %p274
      %p276 = pneg %p275
      // Predicated region
      $region49: #{tpu_custom_call.1} parent=5 // pred_check
        _
      $region50: #{tpu_custom_call.1} parent=5 // pred_check_branch
        %278 = sbr.rel (%p275) target = $region52
      $region51: #{tpu_custom_call.1} parent=5 // pred_region
        %s279 = ssub.s32 %s18, 1
        // Predicated region
        $region53: #{tpu_custom_call.1} parent=51 // pred_check
          %p280 = pneg %p65
        $region54: #{tpu_custom_call.1} parent=51 // pred_check_branch
          %282 = sbr.rel (%p280) target = $region56
        $region55: #{tpu_custom_call.1} parent=51 // pred_region
          %283 = dma.done [#allocation5], 128
        $region56: #{tpu_custom_call.1} parent=51 // pred_fallthru
          _
        %p284 = scmp.lt.s32.totalorder %s23, 1
        %s285 = scalar_select %p284, %s23, 1
        %s286 = smul.addr %s285, 4
        %s287 = smul.addr %s286, 4
        %s288 = scalar_lea.vmem %s0, %s287
        %p289 = pneg %p44
        %p290 = pneg %p41
        %p291 = pneg %p65
        %p292 = pneg %p62
        %p293 = pneg %p86
        %p294 = pneg %p83
        %p295 = pneg %p107
        %p296 = pneg %p104
        %p297 = pneg %p128
        %p298 = pneg %p125
        %p299 = pneg %p149
        %p300 = pneg %p146
        %p301 = pneg %p170
        %p302 = pneg %p167
        %p303 = pneg %p191
        %p304 = pneg %p188
        %p305 = pneg %p217
        %p306 = pneg %p214
        %s307 = sand.u32 %s204, 1
        %s308 = scalar_lea.sflag [#allocation6], %s307
        %s309 = sand.u32 %s204, 1
        %s310 = smul.addr %s309, 8
        %s311 = scalar_lea.vmem [#allocation7], %s310
        %p312 = scmp.lt.s32.totalorder %s23, 1
        %s313 = scalar_select %p312, %s23, 1
        %s314 = smul.addr %s313, 4
        %s315 = smul.addr %s314, 4
        %s316 = scalar_lea.vmem %s0, %s315
        %v317 = vld [vmem:[%s316] sm:$0xf]
        %s318 = scalar_lea.vmem %s316, 4
        %v319 = vld [vmem:[%s318] sm:$0xf]
        %v320 = vmax.f32 %v317, %v319
        %s321 = scalar_lea.vmem %s316, 8
        %v322 = vld [vmem:[%s321] sm:$0xf]
        %s323 = scalar_lea.vmem %s316, 12
        %v324 = vld [vmem:[%s323] sm:$0xf]
        %v325 = vmax.f32 %v322, %v324
        %v326 = vmax.f32 %v320, %v325
        %vm327 = vcmask 830464
        %328 = vst.msk [vmem:[#allocation2] sm:$0xf] %vm327, 0.0
        %330 = vrot.lane.b32.xlu0 %v326, 11
        %v331 = vpop.permute.xlu0 %330
        %vm333 = vcmask 150616
        %334 = vst.msk [vmem:[#allocation2] sm:$0xf] %vm333, %v331
        %335 = vrot.lane.b32.xlu0 %v326, 13
        %v336 = vpop.permute.xlu0 %335
        %vm338 = vcmask 232616
        %339 = vst.msk [vmem:[#allocation2] sm:$0xf] %vm338, %v336
        %340 = vrot.lane.b32.xlu0 %v326, 15
        %v341 = vpop.permute.xlu0 %340
        %vm343 = vcmask 314616
        %344 = vst.msk [vmem:[#allocation2] sm:$0xf] %vm343, %v341
        %345 = vrot.lane.b32.xlu0 %v326, 17
        %v346 = vpop.permute.xlu0 %345
        %vm348 = vcmask 396616
        %349 = vst.msk [vmem:[#allocation2] sm:$0xf] %vm348, %v346
        %350 = vrot.lane.b32.xlu0 %v326, 19
        %v351 = vpop.permute.xlu0 %350
        %vm353 = vcmask 478616
        %354 = vst.msk [vmem:[#allocation2] sm:$0xf] %vm353, %v351
        %355 = vrot.lane.b32.xlu0 %v326, 21
        %v356 = vpop.permute.xlu0 %355
        %vm358 = vcmask 560616
        %359 = vst.msk [vmem:[#allocation2] sm:$0xf] %vm358, %v356
        %360 = vrot.lane.b32.xlu0 %v326, 23
        %v361 = vpop.permute.xlu0 %360
        %vm363 = vcmask 642616
        %364 = vst.msk [vmem:[#allocation2] sm:$0xf] %vm363, %v361
        %365 = vrot.lane.b32.xlu0 %v326, 25
        %v366 = vpop.permute.xlu0 %365
        %vm368 = vcmask 724616
        %369 = vst.msk [vmem:[#allocation2] sm:$0xf] %vm368, %v366
        %v370 = vld [vmem:[%s7] sm:$0x1]
        %v371 = vld [vmem:[#allocation2] sm:$0xf]
        %v373 = vrot.slane %v371, 4
        %374 = vrot.lane.b32.xlu0 %v373, 127
        %v375 = vpop.permute.xlu0 %374
        %377 = vrot.lane.b32.xlu0 %v371, 126
        %v378 = vpop.permute.xlu0 %377
        %380 = vrot.lane.b32.xlu0 %v373, 118
        %v381 = vpop.permute.xlu0 %380
        %383 = vrot.lane.b32.xlu0 %v371, 117
        %v384 = vpop.permute.xlu0 %383
        %386 = vrot.lane.b32.xlu0 %v373, 116
        %v387 = vpop.permute.xlu0 %386
        %389 = vrot.lane.b32.xlu0 %v371, 108
        %v390 = vpop.permute.xlu0 %389
        %392 = vrot.lane.b32.xlu0 %v373, 107
        %v393 = vpop.permute.xlu0 %392
        %395 = vrot.lane.b32.xlu0 %v371, 106
        %v396 = vpop.permute.xlu0 %395
        %vm397 = vcmask 1043456
        %v398 = vsel %vm397, %v371, %v375
        %v399 = vsel %vm397, %v378, %v381
        %v400 = vsel %vm397, %v384, %v387
        %v401 = vsel %vm397, %v390, %v393
        %v402 = vld [vmem:[#allocation4] sm:$0xff]
        %vm403 = vcmask 293888
        %v405 = vsel %vm403, %v402, 0
        %v407 = vsel %vm397, %v396, 0
        %409 = vmatprep.subr.mxu0 0.0
        %410 = vmatpush1.msra.mxu0 %v398
        %411 = vmatprep.subr.mxu0 0.0
        %412 = vmatpush1.msra.mxu0 %v399
        %413 = vmatprep.subr.mxu0 0.0
        %414 = vmatpush1.msra.mxu0 %v400
        %415 = vmatprep.subr.mxu0 0.0
        %416 = vmatpush1.msra.mxu0 %v401
        %417 = vmatprep.subr.mxu0 0.0
        %418 = vmatpush1.msra.mxu0 %v407
        %419 = vmatprep.subr.mxu0 0.0
        %420 = vmatpush1.msra.mxu0 0.0
        %421 = vmatprep.subr.mxu0 0.0
        %422 = vmatpush1.msra.mxu0 0.0
        %423 = vmatprep.subr.mxu0 0.0
        %424 = vmatpush1.msra.mxu0 0.0
        %425 = vmatprep.subr.mxu0 0.0
        %426 = vmatpush1.msra.mxu0 0.0
        %427 = vmatprep.subr.mxu0 0.0
        %428 = vmatpush1.msra.mxu0 0.0
        %429 = vmatprep.subr.mxu0 0.0
        %430 = vmatpush1.msra.mxu0 0.0
        %431 = vmatprep.subr.mxu0 0.0
        %432 = vmatpush1.msra.mxu0 0.0
        %433 = vmatprep.subr.mxu0 0.0
        %434 = vmatpush1.msra.mxu0 0.0
        %435 = vmatprep.subr.mxu0 0.0
        %436 = vmatpush1.msra.mxu0 0.0
        %437 = vmatprep.subr.mxu0 0.0
        %438 = vmatpush1.msra.mxu0 0.0
        %439 = vmatprep.subr.mxu0 0.0
        %440 = vmatpush1.msra.mxu0 0.0
        %441 = vmatprep.subr.mxu0 0.0
        %442 = vmatpush1.msra.mxu0 0.0
        %443 = vmatprep.subr.mxu0 0.0
        %444 = vmatpush1.msra.mxu0 0.0
        %445 = vmatprep.subr.mxu0 0.0
        %446 = vmatpush1.msra.mxu0 0.0
        %447 = vmatprep.subr.mxu0 0.0
        %448 = vmatpush1.msra.mxu0 0.0
        %449 = vmatprep.subr.mxu0 0.0
        %450 = vmatpush1.msra.mxu0 0.0
        %451 = vmatprep.subr.mxu0 0.0
        %452 = vmatpush1.msra.mxu0 0.0
        %453 = vmatprep.subr.mxu0 0.0
        %454 = vmatpush1.msra.mxu0 0.0
        %455 = vmatprep.subr.mxu0 0.0
        %456 = vmatpush1.msra.mxu0 0.0
        %457 = vmatprep.subr.mxu0 0.0
        %458 = vmatpush1.msra.mxu0 0.0
        %459 = vmatprep.subr.mxu0 0.0
        %460 = vmatpush1.msra.mxu0 0.0
        %461 = vmatprep.subr.mxu0 0.0
        %462 = vmatpush1.msra.mxu0 0.0
        %463 = vmatprep.subr.mxu0 0.0
        %464 = vmatpush1.msra.mxu0 0.0
        %465 = vmatprep.subr.mxu0 0.0
        %466 = vmatpush1.msra.mxu0 0.0
        %467 = vmatprep.subr.mxu0 0.0
        %468 = vmatpush1.msra.mxu0 0.0
        %469 = vmatprep.subr.mxu0 0.0
        %470 = vmatpush1.msra.mxu0 0.0
        %471 = vmatprep.subr.mxu0 0.0
        %472 = vmatpush1.msra.mxu0 0.0
        %473 = vmatprep.mubr.f32.mxu0 0.0
        %474 = vmatmul.mubr.f32.gmra.mrb[0].mxu0 %v405
        %v475 = vpop.f32.mrb[0].mxu0
        %v476 = vadd.f32 0.0, %v475
        %v477 = vpop.f32.mrb[0].mxu0
        %478 = vdwg.mxu0
        %v479 = vld [vmem:[%s2] sm:$0xff]
        %481 = vset.pattern.permute.xlu0 0
        %482 = vperm.xlu0 %481, %v479
        %v483 = vpop.permute.xlu0 %482
        %v485 = vmul.f32 %v476, %v483
        %v486 = vld [vmem:[%s3] sm:$0xff]
        %488 = vset.pattern.permute.xlu0 0
        %489 = vperm.xlu0 %488, %v486
        %v490 = vpop.permute.xlu0 %489
        %v492 = vadd.f32 %v485, %v490
        %v493 = vmax.f32 %v492, 0.0
        %vm494 = vcmask 834560
        %495 = vst.msk [vmem:[#allocation3] sm:$0xff] %vm494, 0.0
        %v497 = vlaneseq
        %v498 = vshrl.u32 %v497, 7
        %v499 = vsub.s32 0, %v498
        %v500 = vrot.slane %v370, %v499
        %v502 = vmul.f32 %v493, %v500
        %504 = vrot.lane.b32.xlu0 %v502, 11
        %v505 = vpop.permute.xlu0 %504
        %vm507 = vcmask 744536
        %508 = vst.msk [vmem:[#allocation3] sm:$0xff] %vm507, %v505
        %v509 = vld [vmem:[#allocation3] sm:$0xff]
        %511 = vrot.lane.b32.xlu0 %v509, 127
        %v512 = vpop.permute.xlu0 %511
        %514 = vrot.lane.b32.xlu0 %v509, 126
        %v515 = vpop.permute.xlu0 %514
        %517 = vrot.lane.b32.xlu0 %v509, 118
        %v518 = vpop.permute.xlu0 %517
        %520 = vrot.lane.b32.xlu0 %v509, 117
        %v521 = vpop.permute.xlu0 %520
        %523 = vrot.lane.b32.xlu0 %v509, 116
        %v524 = vpop.permute.xlu0 %523
        %526 = vrot.lane.b32.xlu0 %v509, 108
        %v527 = vpop.permute.xlu0 %526
        %529 = vrot.lane.b32.xlu0 %v509, 107
        %v530 = vpop.permute.xlu0 %529
        %532 = vrot.lane.b32.xlu0 %v509, 106
        %v533 = vpop.permute.xlu0 %532
        %v535 = vld [vmem:[%s4] sm:$0xff]
        %vm536 = vcmask 588800
        %v538 = vsel %vm536, %v535, 0
        %540 = vmatprep.subr.mxu0 0.0
        %541 = vmatpush1.msra.mxu0 %v509
        %542 = vmatprep.subr.mxu0 0.0
        %543 = vmatpush1.msra.mxu0 %v512
        %544 = vmatprep.subr.mxu0 0.0
        %545 = vmatpush1.msra.mxu0 %v515
        %546 = vmatprep.subr.mxu0 0.0
        %547 = vmatpush1.msra.mxu0 %v518
        %548 = vmatprep.subr.mxu0 0.0
        %549 = vmatpush1.msra.mxu0 %v521
        %550 = vmatprep.subr.mxu0 0.0
        %551 = vmatpush1.msra.mxu0 %v524
        %552 = vmatprep.subr.mxu0 0.0
        %553 = vmatpush1.msra.mxu0 %v527
        %554 = vmatprep.subr.mxu0 0.0
        %555 = vmatpush1.msra.mxu0 %v530
        %556 = vmatprep.subr.mxu0 0.0
        %557 = vmatpush1.msra.mxu0 %v533
        %558 = vmatprep.subr.mxu0 0.0
        %559 = vmatpush1.msra.mxu0 0.0
        %560 = vmatprep.subr.mxu0 0.0
        %561 = vmatpush1.msra.mxu0 0.0
        %562 = vmatprep.subr.mxu0 0.0
        %563 = vmatpush1.msra.mxu0 0.0
        %564 = vmatprep.subr.mxu0 0.0
        %565 = vmatpush1.msra.mxu0 0.0
        %566 = vmatprep.subr.mxu0 0.0
        %567 = vmatpush1.msra.mxu0 0.0
        %568 = vmatprep.subr.mxu0 0.0
        %569 = vmatpush1.msra.mxu0 0.0
        %570 = vmatprep.subr.mxu0 0.0
        %571 = vmatpush1.msra.mxu0 0.0
        %572 = vmatprep.subr.mxu0 0.0
        %573 = vmatpush1.msra.mxu0 0.0
        %574 = vmatprep.subr.mxu0 0.0
        %575 = vmatpush1.msra.mxu0 0.0
        %576 = vmatprep.subr.mxu0 0.0
        %577 = vmatpush1.msra.mxu0 0.0
        %578 = vmatprep.subr.mxu0 0.0
        %579 = vmatpush1.msra.mxu0 0.0
        %580 = vmatprep.subr.mxu0 0.0
        %581 = vmatpush1.msra.mxu0 0.0
        %582 = vmatprep.subr.mxu0 0.0
        %583 = vmatpush1.msra.mxu0 0.0
        %584 = vmatprep.subr.mxu0 0.0
        %585 = vmatpush1.msra.mxu0 0.0
        %586 = vmatprep.subr.mxu0 0.0
        %587 = vmatpush1.msra.mxu0 0.0
        %588 = vmatprep.subr.mxu0 0.0
        %589 = vmatpush1.msra.mxu0 0.0
        %590 = vmatprep.subr.mxu0 0.0
        %591 = vmatpush1.msra.mxu0 0.0
        %592 = vmatprep.subr.mxu0 0.0
        %593 = vmatpush1.msra.mxu0 0.0
        %594 = vmatprep.subr.mxu0 0.0
        %595 = vmatpush1.msra.mxu0 0.0
        %596 = vmatprep.subr.mxu0 0.0
        %597 = vmatpush1.msra.mxu0 0.0
        %598 = vmatprep.subr.mxu0 0.0
        %599 = vmatpush1.msra.mxu0 0.0
        %600 = vmatprep.subr.mxu0 0.0
        %601 = vmatpush1.msra.mxu0 0.0
        %602 = vmatprep.subr.mxu0 0.0
        %603 = vmatpush1.msra.mxu0 0.0
        %604 = vmatprep.mubr.f32.mxu0 0.0
        %605 = vmatmul.mubr.f32.gmra.mrb[0].mxu0 %v538
        %v606 = vpop.f32.mrb[0].mxu0
        %v607 = vadd.f32 0.0, %v606
        %v608 = vpop.f32.mrb[0].mxu0
        %609 = vdwg.mxu0
        %v610 = vld [vmem:[%s5] sm:$0xff]
        %612 = vset.pattern.permute.xlu0 0
        %613 = vperm.xlu0 %612, %v610
        %v614 = vpop.permute.xlu0 %613
        %v616 = vmul.f32 %v607, %v614
        %v617 = vld [vmem:[%s6] sm:$0xff]
        %619 = vset.pattern.permute.xlu0 0
        %620 = vperm.xlu0 %619, %v617
        %v621 = vpop.permute.xlu0 %620
        %v623 = vadd.f32 %v616, %v621
        %v624 = vmax.f32 %v623, 0.0
        %vm625 = vcmask 64512
        %626 = vst.msk [vmem:[%s311] sm:$0xff] %vm625, %v624
        %628 = vrot.lane.b32.xlu0 %v624, 126
        %v629 = vpop.permute.xlu0 %628
        %vm631 = vcmask 130112
        %632 = vst.msk [vmem:[%s311] sm:$0xff] %vm631, %v629
        %633 = vrot.lane.b32.xlu0 %v624, 124
        %v634 = vpop.permute.xlu0 %633
        %vm636 = vcmask 195712
        %637 = vst.msk [vmem:[%s311] sm:$0xff] %vm636, %v634
        %638 = vrot.lane.b32.xlu0 %v624, 122
        %v639 = vpop.permute.xlu0 %638
        %vm641 = vcmask 261312
        %642 = vst.msk [vmem:[%s311] sm:$0xff] %vm641, %v639
        %643 = vrot.lane.b32.xlu0 %v624, 120
        %v644 = vpop.permute.xlu0 %643
        %vm646 = vcmask 326912
        %647 = vst.msk [vmem:[%s311] sm:$0xff] %vm646, %v644
        %648 = vrot.lane.b32.xlu0 %v624, 118
        %v649 = vpop.permute.xlu0 %648
        %vm651 = vcmask 392512
        %652 = vst.msk [vmem:[%s311] sm:$0xff] %vm651, %v649
        %653 = vrot.lane.b32.xlu0 %v624, 116
        %v654 = vpop.permute.xlu0 %653
        %vm656 = vcmask 458112
        %657 = vst.msk [vmem:[%s311] sm:$0xff] %vm656, %v654
        %658 = vrot.lane.b32.xlu0 %v624, 114
        %v659 = vpop.permute.xlu0 %658
        %vm661 = vcmask 523712
        %662 = vst.msk [vmem:[%s311] sm:$0xff] %vm661, %v659
        %s663 = sand.u32 %s204, 1
        %s664 = scalar_lea.sflag [#allocation6], %s663
        %s665 = sand.u32 %s204, 1
        %s666 = smul.addr %s665, 8
        %s667 = scalar_lea.vmem [#allocation7], %s666
        // Predicated region
        $region57: #{tpu_custom_call.1} parent=51 // pred_check
          %p668 = pneg %p214
        $region58: #{tpu_custom_call.1} parent=51 // pred_check_branch
          %670 = sbr.rel (%p668) target = $region60
        $region59: #{tpu_custom_call.1} parent=51 // pred_region
          %s672 = ssub.s32 128, 128
          %673 = vsyncadd %s664, %s672
          %s674 = smul.addr %s23, 128
          %s675 = scalar_lea.hbm %s8, %s674
          %s677 = sshll.u32 %s667, 4
          %s678 = int_to_ptr.vmem [resolvable:$true] %s677
          %680 = dma.vmem_to_hbm [thread:$0]  %s678, 128, %s675, %s664
        $region60: #{tpu_custom_call.1} parent=51 // pred_fallthru
          _
      $region52: #{tpu_custom_call.1} parent=5 // pred_fallthru
        _
      %p681 = scmp.le.s32.totalorder 2, %s18
      // Predicated region
      $region61: #{tpu_custom_call.1} parent=5 // pred_check
        %p682 = pneg %p681
      $region62: #{tpu_custom_call.1} parent=5 // pred_check_branch
        %684 = sbr.rel (%p682) target = $region64
      $region63: #{tpu_custom_call.1} parent=5 // pred_region
        %s685 = ssub.s32 %s18, 2
        // Predicated region
        $region65: #{tpu_custom_call.1} parent=63 // pred_check
          %p686 = pneg %p220
        $region66: #{tpu_custom_call.1} parent=63 // pred_check_branch
          %688 = sbr.rel (%p686) target = $region68
        $region67: #{tpu_custom_call.1} parent=63 // pred_region
          %s689 = sand.u32 %s205, 1
          %s690 = scalar_lea.sflag [#allocation6], %s689
          %s691 = sand.u32 %s205, 1
          %s692 = smul.addr %s691, 8
          %s693 = scalar_lea.vmem [#allocation7], %s692
          %694 = dma.done %s690, 128
        $region68: #{tpu_custom_call.1} parent=63 // pred_fallthru
          _
      $region64: #{tpu_custom_call.1} parent=5 // pred_fallthru
        _
    $region6: #{tpu_custom_call.1} parent=1 // loop_footer
      %s22 = sadd.s32 1, %s18
    $region7: #{tpu_custom_call.1} parent=1 // loop_footer_branch
      %17 = sbr.rel target = $region3
    $region8: #{tpu_custom_call.1} parent=1 // loop_exit
      _
    %695 = vsyncpa [#allocation5], 1
    %s696 = scalar_lea.sflag [#allocation5], 1
    %697 = vsyncpa %s696, 1
    %698 = vsyncpa [#allocation6], 1
    %s699 = scalar_lea.sflag [#allocation6], 1
    %700 = vsyncpa %s699, 1

</llo_original>
